<compile_context>
chip_gen: v6e
topology: v6e:2x2x1
jax: 0.10.0
libtpu: 0.0.40
codegen_flags: <defaults>
</compile_context>

<pallas_src>
import jax
import jax.numpy as jnp
from jax.experimental import pallas as pl
from jax.experimental.pallas import tpu as pltpu


def _round_up(x, m):
    return ((x + m - 1) // m) * m


def weighted_cross_entropy(inputs, targets, class_weights=None, block_n=None):
    """Pallas-TPU equivalent of WeightedCrossEntropyLoss.forward (mean reduction)."""
    n, c = inputs.shape
    dtype = inputs.dtype
    itemsize = jnp.dtype(dtype).itemsize

    # ---- class weights (None / array-like / dict, like the PyTorch __init__) ----
    if class_weights is None:
        w = jnp.ones((c,), dtype=jnp.float32)
    elif isinstance(class_weights, dict):
        w_list = [0.0] * c
        for cid, wt in class_weights.items():
            w_list[int(cid)] = float(wt)
        w = jnp.asarray(w_list, dtype=jnp.float32)
    else:
        w = jnp.asarray(class_weights, dtype=jnp.float32).reshape(c)

    # ---- per-sample weight gather (tiny; removes a per-tile class-weight pass) ----
    t_i32 = targets.astype(jnp.int32)
    valid_t = (t_i32 >= 0) & (t_i32 < c)            # negative / OOB targets contribute 0
    w_t = jnp.where(valid_t, w[jnp.clip(t_i32, 0, c - 1)], 0.0).astype(jnp.float32)
    t_col = t_i32.reshape(n, 1)
    w_col = w_t.reshape(n, 1)

    # ---- generation-aware tile / VMEM budget ----
    try:
        vmem_cap = int(pltpu.get_tpu_info().vmem_capacity_bytes)
    except Exception:  # pragma: no cover - conservative (v7x-sized) fallback
        vmem_cap = 64 * 1024 * 1024
    vmem_limit = int(min(vmem_cap - 8 * 1024 * 1024, int(vmem_cap * 0.85)))

    if block_n is None:
        budget = int(vmem_cap * 0.6)
        lanes_c = _round_up(max(c, 1), 128)          # physical lane padding of a logits row
        # per-row bytes: double-buffered input row + ~4 f32 full-width intermediates
        #                + double-buffered, 128-lane-padded target & weight rows
        per_row = 2 * lanes_c * itemsize + 4 * lanes_c * 4 + 2 * 2 * 128 * 4
        tile_n = budget // per_row
        tile_n = max(8, min(8192, (tile_n // 8) * 8))
    else:
        tile_n = max(8, (block_n // 8) * 8)
    tile_n = min(tile_n, _round_up(n, 8))

    grid_n = pl.cdiv(n, tile_n)

    def _kernel(x_ref, t_ref, wt_ref, out_ref):
        tn, cc = x_ref.shape
        x = x_ref[...]                                   # (tile_n, C) input dtype (f32/bf16)
        t = t_ref[...]                                   # (tile_n, 1) int32
        wt = wt_ref[...]                                 # (tile_n, 1) f32

        # mask rows of the (possibly partial) last batch block; `n` is a static int
        row = (pl.program_id(0) * tn
               + jax.lax.broadcasted_iota(jnp.int32, (tn, 1), 0))
        row_valid = row < n

        # one-hot target select via a (1, C) iota broadcast (no 2-D iota materialized)
        col = jax.lax.broadcasted_iota(jnp.int32, (1, cc), 1)
        onehot = col == t                                # (tile_n, C) bool

        # numerically stable log-sum-exp; pre-exp math stays in the input dtype
        m = jnp.max(x, axis=-1, keepdims=True)
        p = jnp.exp((x - m).astype(jnp.float32))
        lse = jnp.log(jnp.sum(p, axis=-1, keepdims=True)) + m.astype(jnp.float32)

        tgt = jnp.sum(jnp.where(onehot, x, 0), axis=-1,
                      keepdims=True).astype(jnp.float32)  # x[i, t_i]
        per_loss = lse - tgt                              # -log p(t_i)

        num = jnp.sum(jnp.where(row_valid, wt * per_loss, 0.0))
        den = jnp.sum(jnp.where(row_valid, wt, 0.0))

        # single lane-dense partial block: sublane 0 = numerator, sublane 1 = denominator
        sel = jax.lax.broadcasted_iota(jnp.int32, (1, 2, 128), 1)
        out_ref[...] = jnp.where(sel == 0, num, den)

    partials = pl.pallas_call(
        _kernel,
        out_shape=jax.ShapeDtypeStruct((grid_n, 2, 128), jnp.float32),
        grid=(grid_n,),
        in_specs=[
            pl.BlockSpec((tile_n, c), lambda i: (i, 0)),   # logits (no host pad / copy)
            pl.BlockSpec((tile_n, 1), lambda i: (i, 0)),   # targets
            pl.BlockSpec((tile_n, 1), lambda i: (i, 0)),   # per-sample weights
        ],
        out_specs=pl.BlockSpec((1, 2, 128), lambda i: (i, 0, 0)),
        compiler_params=pltpu.CompilerParams(
            dimension_semantics=("parallel",),             # independent per-block partials
            vmem_limit_bytes=vmem_limit,
        ),
    )(inputs, t_col, w_col)

    sums = jnp.sum(partials[:, :, 0], axis=0)              # (2,) = [num, den]
    # NOTE: if every valid target has weight 0, den == 0 and this returns NaN,
    # matching PyTorch's behaviour.
    return sums[0] / sums[1]


def _reference(inputs, targets, class_weights):
    # pure-JAX reference of F.cross_entropy(weight=..., reduction='mean')
    logp = jax.nn.log_softmax(inputs.astype(jnp.float32), axis=-1)
    nll = -jnp.take_along_axis(logp, targets[:, None].astype(jnp.int32), axis=-1)[:, 0]
    if class_weights is None:
        w = jnp.ones_like(nll)
    else:
        w = jnp.asarray(class_weights, jnp.float32)[targets]
    return jnp.sum(w * nll) / jnp.sum(w)


if __name__ == "__main__":
    num_classes = 6
    batch = 8

    # Deterministic "module parameters": class weights (as in __init__ with a list).
    class_weights = jnp.array([1.0, 2.0, 0.5, 1.5, 1.0, 3.0], dtype=jnp.float32)

    key = jax.random.PRNGKey(0)
    k_x, k_t, k_x2, k_t2 = jax.random.split(key, 4)
    inputs = jax.random.normal(k_x, (batch, num_classes), dtype=jnp.float32)
    targets = jax.random.randint(k_t, (batch,), 0, num_classes, dtype=jnp.int32)

    # 1) weighted, f32
    loss = jax.block_until_ready(weighted_cross_entropy(inputs, targets, class_weights))
    ref = _reference(inputs, targets, class_weights)
    assert jnp.allclose(loss, ref, rtol=1e-5, atol=1e-5), (loss, ref)

    # 2) unweighted path (class_weights=None)
    loss_unw = jax.block_until_ready(weighted_cross_entropy(inputs, targets, None))
    ref_unw = _reference(inputs, targets, None)
    assert jnp.allclose(loss_unw, ref_unw, rtol=1e-5, atol=1e-5), (loss_unw, ref_unw)

    # 3) multi-block grid with a partial last block (batch=20, block_n=8 -> grid of 3)
    batch2 = 20
    inputs2 = jax.random.normal(k_x2, (batch2, num_classes), dtype=jnp.float32)
    targets2 = jax.random.randint(k_t2, (batch2,), 0, num_classes, dtype=jnp.int32)
    loss2 = jax.block_until_ready(
        weighted_cross_entropy(inputs2, targets2, class_weights, block_n=8))
    ref2 = _reference(inputs2, targets2, class_weights)
    assert jnp.allclose(loss2, ref2, rtol=1e-5, atol=1e-5), (loss2, ref2)

    # 4) bf16 logits streamed over HBM (pre-exp math stays in bf16 inside the kernel)
    loss_bf16 = jax.block_until_ready(
        weighted_cross_entropy(inputs.astype(jnp.bfloat16), targets, class_weights))
    assert jnp.allclose(loss_bf16, ref, rtol=2e-2, atol=2e-2), (loss_bf16, ref)

    # 5) dict-style class weights (PyTorch __init__ accepts a dict)
    loss_dict = jax.block_until_ready(
        weighted_cross_entropy(
            inputs, targets, {i: float(v) for i, v in enumerate(class_weights)}))
    assert jnp.allclose(loss_dict, ref, rtol=1e-5, atol=1e-5), (loss_dict, ref)

    print("KERNEL_OK")
</pallas_src>

<mosaic_0001>
module attributes {stable_mosaic.version = 11 : i64} {
  func.func @_kernel(%arg0: i32, %arg1: memref<8x6xf32, #tpu.memory_space<vmem>>, %arg2: memref<8x1xi32, #tpu.memory_space<vmem>>, %arg3: memref<8x1xf32, #tpu.memory_space<vmem>>, %arg4: memref<1x2x128xf32, #tpu.memory_space<vmem>>) attributes {dimension_semantics = [#tpu.dimension_semantics<parallel>], iteration_bounds = array<i64: 1>, scalar_prefetch = 0 : i64, scratch_operands = 0 : i64, tpu.core_type = #tpu.core_type<tc>, window_params = [{transform_indices = @transform_0, window_bounds = array<i64: 8, 6>}, {transform_indices = @transform_1, window_bounds = array<i64: 8, 1>}, {transform_indices = @transform_2, window_bounds = array<i64: 8, 1>}, {transform_indices = @transform_3, window_bounds = array<i64: 1, 2, 128>}]} {
    %c0 = arith.constant 0 : index
    %c0_0 = arith.constant 0 : index
    %0 = vector.load %arg1[%c0, %c0_0] : memref<8x6xf32, #tpu.memory_space<vmem>>, vector<8x6xf32>
    %c0_1 = arith.constant 0 : index
    %c0_2 = arith.constant 0 : index
    %1 = vector.load %arg2[%c0_1, %c0_2] : memref<8x1xi32, #tpu.memory_space<vmem>>, vector<8x1xi32>
    %c0_3 = arith.constant 0 : index
    %c0_4 = arith.constant 0 : index
    %2 = vector.load %arg3[%c0_3, %c0_4] : memref<8x1xf32, #tpu.memory_space<vmem>>, vector<8x1xf32>
    %c8_i32 = arith.constant 8 : i32
    %3 = arith.muli %arg0, %c8_i32 : i32
    %4 = tpu.iota {dimensions = array<i32: 0>} : vector<8x1xi32>
    %5 = vector.broadcast %3 : i32 to vector<8x1xi32>
    %6 = arith.addi %5, %4 : vector<8x1xi32>
    %c8_i32_5 = arith.constant 8 : i32
    %7 = vector.broadcast %c8_i32_5 : i32 to vector<8x1xi32>
    %8 = arith.cmpi slt, %6, %7 : vector<8x1xi32>
    %9 = tpu.iota {dimensions = array<i32: 1>} : vector<1x6xi32>
    %10 = vector.broadcast %9 : vector<1x6xi32> to vector<8x6xi32>
    %11 = vector.broadcast %1 : vector<8x1xi32> to vector<8x6xi32>
    %12 = arith.cmpi eq, %10, %11 : vector<8x6xi32>
    %cst = arith.constant dense<0xFF800000> : vector<8xf32>
    %13 = vector.multi_reduction <maximumf>, %0, %cst [1] : vector<8x6xf32> to vector<8xf32>
    %14 = vector.shape_cast %13 : vector<8xf32> to vector<8x1xf32>
    %15 = vector.broadcast %14 : vector<8x1xf32> to vector<8x6xf32>
    %16 = arith.subf %0, %15 : vector<8x6xf32>
    %17 = math.exp %16 : vector<8x6xf32>
    %cst_6 = arith.constant dense<0.000000e+00> : vector<8xf32>
    %18 = vector.multi_reduction <add>, %17, %cst_6 [1] : vector<8x6xf32> to vector<8xf32>
    %19 = vector.shape_cast %18 : vector<8xf32> to vector<8x1xf32>
    %20 = math.log %19 : vector<8x1xf32>
    %21 = arith.addf %20, %14 : vector<8x1xf32>
    %c0_i32 = arith.constant 0 : i32
    %22 = arith.sitofp %c0_i32 : i32 to f32
    %23 = vector.broadcast %22 : f32 to vector<8x6xf32>
    %24 = arith.select %12, %0, %23 : vector<8x6xi1>, vector<8x6xf32>
    %cst_7 = arith.constant dense<0.000000e+00> : vector<8xf32>
    %25 = vector.multi_reduction <add>, %24, %cst_7 [1] : vector<8x6xf32> to vector<8xf32>
    %26 = vector.shape_cast %25 : vector<8xf32> to vector<8x1xf32>
    %27 = arith.subf %21, %26 : vector<8x1xf32>
    %28 = arith.mulf %2, %27 : vector<8x1xf32>
    %cst_8 = arith.constant 0.000000e+00 : f32
    %29 = vector.broadcast %cst_8 : f32 to vector<8x1xf32>
    %30 = arith.select %8, %28, %29 : vector<8x1xi1>, vector<8x1xf32>
    %31 = vector.shape_cast %30 : vector<8x1xf32> to vector<1x8x1xf32>
    %cst_9 = arith.constant dense<0.000000e+00> : vector<1xf32>
    %32 = vector.multi_reduction <add>, %31, %cst_9 [1, 2] : vector<1x8x1xf32> to vector<1xf32>
    %33 = vector.shape_cast %32 : vector<1xf32> to vector<1x1x1xf32>
    %34 = vector.extract %33[0, 0, 0] : f32 from vector<1x1x1xf32>
    %cst_10 = arith.constant 0.000000e+00 : f32
    %35 = vector.broadcast %cst_10 : f32 to vector<8x1xf32>
    %36 = arith.select %8, %2, %35 : vector<8x1xi1>, vector<8x1xf32>
    %37 = vector.shape_cast %36 : vector<8x1xf32> to vector<1x8x1xf32>
    %cst_11 = arith.constant dense<0.000000e+00> : vector<1xf32>
    %38 = vector.multi_reduction <add>, %37, %cst_11 [1, 2] : vector<1x8x1xf32> to vector<1xf32>
    %39 = vector.shape_cast %38 : vector<1xf32> to vector<1x1x1xf32>
    %40 = vector.extract %39[0, 0, 0] : f32 from vector<1x1x1xf32>
    %41 = tpu.iota {dimensions = array<i32: 1>} : vector<1x2x128xi32>
    %c0_i32_12 = arith.constant 0 : i32
    %42 = vector.broadcast %c0_i32_12 : i32 to vector<1x2x128xi32>
    %43 = arith.cmpi eq, %41, %42 : vector<1x2x128xi32>
    %44 = vector.broadcast %34 : f32 to vector<1x2x128xf32>
    %45 = vector.broadcast %40 : f32 to vector<1x2x128xf32>
    %46 = arith.select %43, %44, %45 : vector<1x2x128xi1>, vector<1x2x128xf32>
    %c0_13 = arith.constant 0 : index
    %c0_14 = arith.constant 0 : index
    %c0_15 = arith.constant 0 : index
    %47 = vector.load %arg4[%c0_13, %c0_14, %c0_15] : memref<1x2x128xf32, #tpu.memory_space<vmem>>, vector<1x2x128xf32>
    tpu.vector_store %arg4[%c0_13, %c0_14, %c0_15], %46 {strides = array<i32>} : memref<1x2x128xf32, #tpu.memory_space<vmem>>, vector<1x2x128xf32>,
    return
  }
  func.func @transform_0(%arg0: i32) -> (i32, i32) {
    %c0_i32 = arith.constant 0 : i32
    %c0_i32_0 = arith.constant 0 : i32
    return %arg0, %c0_i32 : i32, i32
  }
  func.func @transform_1(%arg0: i32) -> (i32, i32) {
    %c0_i32 = arith.constant 0 : i32
    %c0_i32_0 = arith.constant 0 : i32
    return %arg0, %c0_i32 : i32, i32
  }
  func.func @transform_2(%arg0: i32) -> (i32, i32) {
    %c0_i32 = arith.constant 0 : i32
    %c0_i32_0 = arith.constant 0 : i32
    return %arg0, %c0_i32 : i32, i32
  }
  func.func @transform_3(%arg0: i32) -> (i32, i32, i32) {
    %c0_i32 = arith.constant 0 : i32
    %c0_i32_0 = arith.constant 0 : i32
    %c0_i32_1 = arith.constant 0 : i32
    return %arg0, %c0_i32, %c0_i32_0 : i32, i32, i32
  }
}

</mosaic_0001>

<llo_original>
// kernel: tpu_custom_call.1
$region0: #{tpu_custom_call.1}
  #allocation0 [shape = 'u32[]', space=smem, size = 0x4, offset = 0x4, fixed_abs, tag = 'smem constant byte address 0x4 - core index']
  #allocation1 [shape = 'u32[144,128]{1,0:T(1,128)}', space=vmem, size = 0x12000, scoped, tag = 'internal scratch']
  %s0 = inlined_call_operand.vmem [shape: f32[8,6], index: 0, kind: input, shape index: {}]
  %s1 = inlined_call_operand.vmem [shape: s32[8,1], index: 1, kind: input, shape index: {}]
  %s2 = inlined_call_operand.vmem [shape: f32[8,1], index: 2, kind: input, shape index: {}]
  %s3 = inlined_call_operand.hbm [shape: f32[1,2,128], index: 3, kind: output, shape index: {}]
  %s4 = sld [smem:[#allocation0]]
  $region22: #{tpu_custom_call.1} parent=0
    _
  %s6 = ssub.s32 1, %s4
  %s7 = scalar_select 0, %s6, %s4
  $region1: #{tpu_custom_call.1} parent=0
    #allocation2 [shape = 'u8[1024]{0}', space=vmem, size = 0x400, scoped, tag = 'output window, operand 0, single buffered']
    #allocation3 [shape = 's32[1]{0}', space=sflag, size = 0x4, scoped, tag = 'scoped memory for tpu_custom_call.1']
    %8 = vsyncpa [#allocation3], 0
    // Predicated region
    $region2: #{tpu_custom_call.1} parent=1 // pred_check
      _
    $region3: #{tpu_custom_call.1} parent=1 // pred_check_branch
      %10 = sbr.rel (0) target = $region5
    $region4: #{tpu_custom_call.1} parent=1 // pred_region
      _
    $region5: #{tpu_custom_call.1} parent=1 // pred_fallthru
      _
    // Predicated region
    $region6: #{tpu_custom_call.1} parent=1 // pred_check
      _
    $region7: #{tpu_custom_call.1} parent=1 // pred_check_branch
      %12 = sbr.rel (0) target = $region9
    $region8: #{tpu_custom_call.1} parent=1 // pred_region
      _
    $region9: #{tpu_custom_call.1} parent=1 // pred_fallthru
      _
    // Predicated region
    $region10: #{tpu_custom_call.1} parent=1 // pred_check
      _
    $region11: #{tpu_custom_call.1} parent=1 // pred_check_branch
      %14 = sbr.rel (0) target = $region13
    $region12: #{tpu_custom_call.1} parent=1 // pred_region
      _
    $region13: #{tpu_custom_call.1} parent=1 // pred_fallthru
      _
    %v15 = vld [vmem:[%s0] sm:$0xff]
    %v16 = vld [vmem:[%s1] sm:$0xff]
    %v17 = vld [vmem:[%s2] sm:$0xff]
    %s18 = smul.u32 0, 8
    %v19 = vlaneseq
    %v20 = vshrl.u32 %v19, 7
    %v21 = vstv %s18
    %v22 = vadd.s32 %v21, %v20
    %vm23 = vcmp.lt.s32.totalorder %v22, 8
    %v24 = vlaneseq
    %v25 = vand.u32 %v24, 127
    %26 = vset.pattern.permute.xlu0 0
    %27 = vperm.xlu0 %26, %v16
    %v28 = vpop.permute.xlu0 %27
    %vm29 = vcmp.eq.s32.totalorder %v25, %v28
    %vm30 = vcmask 48128
    %v31 = vsel %vm30, %v15, -inf
    %32 = vmax.xlane.f32.xlu0 %v31
    %v33 = vpop.xlane.xlu0 %32
    %v34 = vsub.f32 %v15, %v33
    %v35 = vmul.f32 %v34, 1.442695
    %v36 = vpow.pop %v35
    %v37 = vsel %vm30, %v36, 0.0
    %38 = vadd.xlane.f32.xlu0 %v37
    %v39 = vpop.xlane.xlu0 %38
    %v40 = vlog2.pop %v39
    %v41 = vmul.f32 %v40, 0.6931472
    %v42 = vadd.f32 %v41, %v33
    %v43 = vsel %vm29, %v15, 0.0
    %v44 = vsel %vm30, %v43, 0.0
    %45 = vadd.xlane.f32.xlu0 %v44
    %v46 = vpop.xlane.xlu0 %45
    %v47 = vsub.f32 %v42, %v46
    %v48 = vmul.f32 %v17, %v47
    %v49 = vsel %vm23, %v48, 0.0
    %vm50 = vcmask 7168
    %v51 = vsel %vm50, %v49, 0.0
    %52 = vadd.xlane.f32.xlu0 %v51
    %v53 = vpop.xlane.xlu0 %52
    %v54 = vrot.slane %v53, 4
    %v55 = vadd.f32 %v53, %v54
    %v56 = vrot.slane %v55, 2
    %v57 = vadd.f32 %v55, %v56
    %v58 = vrot.slane %v57, 1
    %v59 = vadd.f32 %v57, %v58
    %s60 = vtos %v59
    %v61 = vsel %vm23, %v17, 0.0
    %v62 = vsel %vm50, %v61, 0.0
    %63 = vadd.xlane.f32.xlu0 %v62
    %v64 = vpop.xlane.xlu0 %63
    %v65 = vrot.slane %v64, 4
    %v66 = vadd.f32 %v64, %v65
    %v67 = vrot.slane %v66, 2
    %v68 = vadd.f32 %v66, %v67
    %v69 = vrot.slane %v68, 1
    %v70 = vadd.f32 %v68, %v69
    %s71 = vtos %v70
    %vm72 = vcmp.eq.s32.totalorder %v20, 0
    %v73 = vstv %s60
    %v74 = vstv %s71
    %v75 = vsel %vm72, %v73, %v74
    %76 = vst [vmem:[#allocation2] sm:$0x3] %v75
    // Predicated region
    $region14: #{tpu_custom_call.1} parent=1 // pred_check
      _
    $region15: #{tpu_custom_call.1} parent=1 // pred_check_branch
      %78 = sbr.rel (0) target = $region17
    $region16: #{tpu_custom_call.1} parent=1 // pred_region
      %s80 = ssub.s32 32, 32
      %81 = vsyncadd [#allocation3], %s80
      %s83 = sshll.u32 [#allocation2], 4
      %s84 = int_to_ptr.vmem [resolvable:$true] %s83
      %86 = dma.vmem_to_hbm [thread:$0]  %s84, 32, %s3, [#allocation3]
    $region17: #{tpu_custom_call.1} parent=1 // pred_fallthru
      _
    // Predicated region
    $region18: #{tpu_custom_call.1} parent=1 // pred_check
      _
    $region19: #{tpu_custom_call.1} parent=1 // pred_check_branch
      %88 = sbr.rel (0) target = $region21
    $region20: #{tpu_custom_call.1} parent=1 // pred_region
      %89 = dma.done [#allocation3], 32
    $region21: #{tpu_custom_call.1} parent=1 // pred_fallthru
      _
    %90 = vsyncpa [#allocation3], 1

</llo_original>
